<compile_context>
chip_gen: v7x
topology: tpu7x:2x2x1
jax: 0.10.0
libtpu: 0.0.40
codegen_flags: <defaults>
</compile_context>

<pallas_src>
import functools
import math

import jax
import jax.numpy as jnp
from jax.experimental import pallas as pl
from jax.experimental.pallas import tpu as pltpu

# ----------------------------- constants ------------------------------------
OMEGA = 10.0          # WingLoss omega
EPSILON = 2.0         # WingLoss epsilon
WING_C = OMEGA - OMEGA * math.log(1.0 + OMEGA / EPSILON)
ALPHA = 0.25          # focal alpha
GAMMA = 2.0           # focal gamma (module uses a *linear* (1-p)*gamma factor)
REG_SCALE = 1.0 / 192.0

# slab A (residual slab), channel-major, priors on the 128-lane axis:
#   rows  0:14  |landm_pred*scale - landm_t|   (pre-masked by pos -> 0)
#   rows 14:16  zero padding (keeps the wing group 16 rows, sublane aligned)
#   rows 16:20  |loc_pred*scale  - loc_t|      (pre-masked by pos -> 0)
_CH_A = 20
_LM_ROWS = 16          # rows 0:16 -> WingLoss (pad rows contribute exactly 0)
_BOX_OFF = 16          # rows 16:20 -> SmoothL1 (aligned start)

# slab B (focal slab), 8-way sublane-folded so the focal math runs dense:
#   rows  0:8   conf logits     rows 8:16  y_true     rows 16:24  sel mask
_CH_B = 24

_TL_MAX = 32768        # lane tile (priors per grid step); multiple of 1024
_TL_MIN = 1024         # keeps TL//8 a multiple of 128
_NUM_CORE_SPLITS = 2   # leading "parallel" grid axis (both TensorCores on v7x)


def _round_up(x, m):
    return ((x + m - 1) // m) * m


# ----------------------------- Pallas kernel --------------------------------
def _multibox_loss_kernel(diff_ref, foc_ref, out_ref):
    """One grid step: masked elementwise losses -> 3 scalars -> out block.

    out_ref is an (8, 128) f32 VMEM block, resident across the inner
    ("arbitrary") grid axis; rows 0/1/2 accumulate the SmoothL1 / Wing /
    focal sums (broadcast across lanes), rows 3:8 stay zero.
    """
    i = pl.program_id(1)

    @pl.when(i == 0)
    def _init():
        out_ref[...] = jnp.zeros_like(out_ref)

    f32 = jnp.float32

    # ---- landmarks: WingLoss on |pred - target| (rows 0:16, pads give 0) ----
    lm = diff_ref[pl.ds(0, _LM_ROWS), :].astype(f32)
    wing = jnp.where(lm < OMEGA,
                     OMEGA * jnp.log(1.0 + lm * (1.0 / EPSILON)),
                     lm - WING_C)

    # ---- boxes: F.smooth_l1_loss (beta=1) on |pred - target| (rows 16:20) ---
    bx = diff_ref[pl.ds(_BOX_OFF, 4), :].astype(f32)
    sl1 = jnp.where(bx < 1.0, 0.5 * bx * bx, bx - 0.5)

    # ---- confidence: focal_loss_sigmoid on the 8-way folded dense slab ------
    # exact formula of the module, written with one exp + one log; p (sigmoid)
    # is derived from the same exp via an approximate reciprocal + select.
    x = foc_ref[pl.ds(0, 8), :].astype(f32)
    y = foc_ref[pl.ds(8, 8), :].astype(f32)
    sel = foc_ref[pl.ds(16, 8), :].astype(f32)
    t = jnp.exp(-jnp.abs(x))                   # single EUP exp, t in (0, 1]
    log1pt = jnp.log(1.0 + t)                  # single EUP log
    log_p = jnp.minimum(x, 0.0) - log1pt       # log(sigmoid(x))
    log_1mp = jnp.minimum(-x, 0.0) - log1pt    # log(1 - sigmoid(x))
    r = pl.reciprocal(1.0 + t, approx=True)    # EUP approx recip (cheap slot)
    p = jnp.where(x >= 0.0, r, 1.0 - r)        # sigmoid(x)
    foc = (-y * (1.0 - ALPHA) * ((1.0 - p) * GAMMA) * log_p
           - (1.0 - y) * ALPHA * (p * p) * log_1mp)
    foc = jnp.where(sel > 0.0, foc, 0.0)

    # ---- one cross-lane reduce per loss per step (XLU is otherwise idle) ----
    # then a single-vreg RMW into the resident output block: no wide
    # partially-occupied accumulators, no per-step HBM writeback.
    s_sl1 = jnp.sum(sl1)
    s_wing = jnp.sum(wing)
    s_foc = jnp.sum(foc)
    row = jax.lax.broadcasted_iota(jnp.int32, out_ref.shape, 0)
    contrib = jnp.where(row == 0, s_sl1,
              jnp.where(row == 1, s_wing,
              jnp.where(row == 2, s_foc, 0.0)))
    out_ref[...] += contrib


# ----------------------------- match() glue (plain JAX) ---------------------
# TODO(synk): prior<->GT matching (IoU + argmax) and the descending-sort
# hard-negative ranking are data-dependent gathers/sorts with no clean Pallas
# equivalent; they stay as batched JAX ops.
def _point_form(priors):
    return jnp.concatenate([priors[:, :2] - priors[:, 2:] / 2.0,
                            priors[:, :2] + priors[:, 2:] / 2.0], axis=1)


def _jaccard(box_a, box_b):
    max_xy = jnp.minimum(box_a[:, None, 2:], box_b[None, :, 2:])
    min_xy = jnp.maximum(box_a[:, None, :2], box_b[None, :, :2])
    wh = jnp.maximum(max_xy - min_xy, 0.0)
    inter = wh[..., 0] * wh[..., 1]
    area_a = ((box_a[:, 2] - box_a[:, 0]) * (box_a[:, 3] - box_a[:, 1]))[:, None]
    area_b = ((box_b[:, 2] - box_b[:, 0]) * (box_b[:, 3] - box_b[:, 1]))[None, :]
    union = area_a + area_b - inter
    # guard degenerate / padded GT boxes (zero area) against 0/0 -> NaN
    return inter / jnp.maximum(union, 1e-12)


def _encode(matched, priors, variances):
    g_cxcy = (matched[:, :2] + matched[:, 2:]) / 2.0 - priors[:, :2]
    g_cxcy = g_cxcy / (variances[0] * priors[:, 2:])
    g_wh = (matched[:, 2:] - matched[:, :2]) / priors[:, 2:]
    g_wh = jnp.log(g_wh) / variances[1]
    return jnp.concatenate([g_cxcy, g_wh], axis=1)


def _encode_landm(matched, priors, variances):
    m = matched.reshape(matched.shape[0], 7, 2)          # 7 keypoints x (x,y)
    pr = priors[:, None, :]
    g = (m - pr[..., :2]) / (variances[0] * pr[..., 2:])
    return g.reshape(matched.shape[0], 14)


def _match(threshold, truths, priors, variances, labels, landms):
    """Standard RetinaFace-style match() (utils.box_utils.match) in JAX."""
    # padded GT rows (label <= 0) never match anything
    valid_row = labels > 0.0
    overlaps = _jaccard(truths, _point_form(priors))     # (G, P)
    overlaps = jnp.where(valid_row[:, None], overlaps, -1.0)

    best_prior_overlap = jnp.max(overlaps, axis=1)       # (G,)
    best_prior_idx = jnp.argmax(overlaps, axis=1)        # (G,)
    valid_gt = best_prior_overlap >= 0.2

    best_truth_overlap = jnp.max(overlaps, axis=0)       # (P,)
    best_truth_idx = jnp.argmax(overlaps, axis=0)        # (P,)

    # index_fill_(0, best_prior_idx_filter, 2)
    best_truth_overlap = best_truth_overlap.at[best_prior_idx].set(
        jnp.where(valid_gt, 2.0, best_truth_overlap[best_prior_idx]))
    # ensure every gt's best prior matches that gt
    best_truth_idx = best_truth_idx.at[best_prior_idx].set(
        jnp.arange(truths.shape[0]))

    matches = truths[best_truth_idx]                     # (P, 4)
    conf = labels[best_truth_idx]                        # (P,)
    conf = jnp.where(best_truth_overlap < threshold, 0.0, conf)

    loc = _encode(matches, priors, variances)
    landm = _encode_landm(landms[best_truth_idx], priors, variances)

    # early-return branch of the original match() (no GT with overlap >= 0.2)
    any_valid = jnp.any(valid_gt)
    conf = jnp.where(any_valid, conf, 0.0)
    loc = jnp.where(any_valid, loc, 0.0)
    return loc, conf, landm


# ----------------------------- target / mask preparation --------------------
def _prepare_targets(conf_data, reg_data, priors, targets,
                     overlap_thresh, neg_pos_ratio, variances):
    B, P, _ = reg_data.shape

    match_fn = jax.vmap(
        lambda truths, labels, landms: _match(
            overlap_thresh, truths, priors, variances, labels, landms))
    loc_t, conf_t, landm_t = match_fn(
        targets[:, :, :4], targets[:, :, -1], targets[:, :, 4:-1])
    # loc_t (B,P,4), conf_t (B,P), landm_t (B,P,14)

    pos = conf_t > 0.0                         # (B, P) bool  (pos1 / pos)
    y_true = jnp.where(pos, 1.0, conf_t)       # conf_t[pos] = 1

    # --- hard negative mining (rank by raw logit, positives forced last) ---
    conf_flat = conf_data[..., 0]                          # (B, P)
    loss_c_rank = jnp.where(pos, -1e6, conf_flat)          # loss_c[pos]=-1000000
    loss_idx = jnp.argsort(-loss_c_rank, axis=1)           # descending sort
    # inverse permutation via scatter (cheaper than a second argsort)
    rows = jnp.arange(B, dtype=jnp.int32)[:, None]
    ranks = jnp.broadcast_to(jnp.arange(P, dtype=jnp.int32), (B, P))
    idx_rank = jnp.zeros((B, P), jnp.int32).at[rows, loss_idx].set(ranks)
    num_pos = jnp.sum(pos.astype(jnp.int32), axis=1, keepdims=True)
    num_neg = jnp.minimum(neg_pos_ratio * num_pos, P - 1)
    neg = idx_rank < num_neg
    sel = jnp.logical_or(pos, neg)                         # (pos_idx+neg_idx)>0

    # --- masked absolute residuals (kernel streams diffs, not pred+target) ---
    loc_abs = jnp.abs(reg_data[:, :, 0:4] * REG_SCALE - loc_t)
    lm_abs = jnp.abs(reg_data[:, :, 4:18] * REG_SCALE - landm_t)
    loc_abs = jnp.where(pos[..., None], loc_abs, 0.0)      # select, NaN-safe
    lm_abs = jnp.where(pos[..., None], lm_abs, 0.0)
    return loc_abs, lm_abs, conf_flat, y_true, pos, sel


# ----------------------------- wrapper ---------------------------------------
def multibox_loss(conf_data, reg_data, priors, targets,
                  *, overlap_thresh=0.35, neg_pos_ratio=3,
                  variances=(0.1, 0.2), slab_dtype=jnp.float32):
    """Returns (loss_l, loss_c, loss_landm) like MultiBoxLoss.forward.

    conf_data: (B, P, 1) raw class logits
    reg_data : (B, P, 18) raw regressions (4 box + 14 landmark)
    priors   : (P, 4) (cx, cy, w, h)
    targets  : (B, G, 19) = 4 box (xyxy) + 14 landmarks + 1 label
    slab_dtype: jnp.bfloat16 halves kernel HBM traffic on v5e/v6e
                (kernel casts back to f32 immediately after load).
    """
    B, P, _ = reg_data.shape
    R = B * P
    f32 = jnp.float32

    loc_abs, lm_abs, conf_flat, y_true, pos, sel = _prepare_targets(
        conf_data, reg_data, priors, targets,
        overlap_thresh, neg_pos_ratio, variances)

    # ---------------- tiling ----------------
    TL = min(_TL_MAX,
             max(_TL_MIN, _round_up(-(-R // _NUM_CORE_SPLITS), _TL_MIN)))
    R_pad = _round_up(R, _NUM_CORE_SPLITS * TL)
    spc = R_pad // (_NUM_CORE_SPLITS * TL)      # grid steps per core
    TL8 = TL // 8
    R_pad8 = R_pad // 8

    # -------- slab A: masked residuals, channel-major, priors on lanes -------
    lm_cm = jnp.moveaxis(lm_abs, -1, 0).reshape(14, R)
    loc_cm = jnp.moveaxis(loc_abs, -1, 0).reshape(4, R)
    slab_a = jnp.concatenate(
        [lm_cm, jnp.zeros((2, R), f32), loc_cm], axis=0)          # (20, R)
    slab_a = jnp.pad(slab_a, ((0, 0), (0, R_pad - R))).astype(slab_dtype)

    # -------- slab B: focal channels, 8-way sublane-folded (dense rows) ------
    def _fold8(v):                                                # (B,P)->(8,R8)
        v = jnp.pad(v.reshape(R).astype(f32), (0, R_pad - R))
        return v.reshape(8, R_pad8)
    slab_b = jnp.concatenate(
        [_fold8(conf_flat), _fold8(y_true), _fold8(sel.astype(f32))],
        axis=0).astype(slab_dtype)                                # (24, R_pad8)

    out = pl.pallas_call(
        _multibox_loss_kernel,
        out_shape=jax.ShapeDtypeStruct((_NUM_CORE_SPLITS * 8, 128), f32),
        grid_spec=pltpu.PrefetchScalarGridSpec(
            num_scalar_prefetch=0,
            grid=(_NUM_CORE_SPLITS, spc),
            in_specs=[
                pl.BlockSpec((_CH_A, TL), lambda c, i: (0, c * spc + i)),
                pl.BlockSpec((_CH_B, TL8), lambda c, i: (0, c * spc + i)),
            ],
            out_specs=pl.BlockSpec((8, 128), lambda c, i: (c, 0)),
        ),
        compiler_params=pltpu.CompilerParams(
            dimension_semantics=("parallel", "arbitrary"),
            vmem_limit_bytes=32 * 1024 * 1024),
    )(slab_a, slab_b)

    # per-core partials live in lane 0 of rows 0..2 of each (8,128) block
    totals = jnp.sum(out.reshape(_NUM_CORE_SPLITS, 8, 128)[:, :3, 0], axis=0)
    sl1_sum, wing_sum, foc_sum = totals[0], totals[1], totals[2]

    # counts come from the mining step (no count channels / accumulators)
    n_pos = jnp.sum(pos.astype(f32))
    n_sel = jnp.sum(sel.astype(f32))

    # Guarded denominators (0/0 protection); a no-op in the normal case.
    loss_l = sl1_sum / jnp.maximum(n_pos * 4.0, 1.0)        # smooth_l1 'mean'
    loss_c = foc_sum / jnp.maximum(n_sel, 1.0)              # focal .mean(0)
    loss_landm = wing_sum / jnp.maximum(n_pos * 14.0, 1.0)  # Wing: sum/(l1+l2)
    return loss_l, loss_c, loss_landm


# ----------------------------- pure-JAX reference ----------------------------
def multibox_loss_reference(conf_data, reg_data, priors, targets,
                            *, overlap_thresh=0.35, neg_pos_ratio=3,
                            variances=(0.1, 0.2)):
    f32 = jnp.float32
    loc_abs, lm_abs, conf_flat, y_true, pos, sel = _prepare_targets(
        conf_data, reg_data, priors, targets,
        overlap_thresh, neg_pos_ratio, variances)

    sl1 = jnp.where(loc_abs < 1.0, 0.5 * loc_abs * loc_abs, loc_abs - 0.5)
    wing = jnp.where(lm_abs < OMEGA,
                     OMEGA * jnp.log(1.0 + lm_abs / EPSILON),
                     lm_abs - WING_C)

    x = conf_flat.astype(f32)
    y = y_true.astype(f32)
    log1pe = jnp.log(1.0 + jnp.exp(-jnp.abs(x)))
    log_p = jnp.minimum(x, 0.0) - log1pe
    log_1mp = jnp.minimum(-x, 0.0) - log1pe
    p = jax.nn.sigmoid(x)
    foc = (-y * (1.0 - ALPHA) * ((1.0 - p) * GAMMA) * log_p
           - (1.0 - y) * ALPHA * (p * p) * log_1mp)
    foc = jnp.where(sel, foc, 0.0)

    n_pos = jnp.sum(pos.astype(f32))
    n_sel = jnp.sum(sel.astype(f32))
    loss_l = jnp.sum(sl1) / jnp.maximum(n_pos * 4.0, 1.0)
    loss_c = jnp.sum(foc) / jnp.maximum(n_sel, 1.0)
    loss_landm = jnp.sum(wing) / jnp.maximum(n_pos * 14.0, 1.0)
    return loss_l, loss_c, loss_landm


# ----------------------------- demo ------------------------------------------
if __name__ == "__main__":
    key = jax.random.PRNGKey(0)
    k1, k2, k3 = jax.random.split(key, 3)

    B, P, G = 2, 32, 2

    # predictions
    conf_data = jax.random.normal(k1, (B, P, 1), jnp.float32)
    reg_data = jax.random.normal(k2, (B, P, 18), jnp.float32) * 10.0

    # priors: 8x4 grid of (cx, cy, w, h)
    cx = (jnp.arange(8, dtype=jnp.float32) + 0.5) / 8.0
    cy = (jnp.arange(4, dtype=jnp.float32) + 0.5) / 4.0
    cxg, cyg = jnp.meshgrid(cx, cy, indexing="ij")
    priors = jnp.stack([cxg.reshape(-1), cyg.reshape(-1),
                        jnp.full((P,), 0.25), jnp.full((P,), 0.25)], axis=1)

    # targets: GT boxes sitting (nearly) on top of specific priors -> positives
    def gt_from_prior(p_idx, jitter):
        c = priors[p_idx]
        return jnp.array([c[0] - c[2] / 2, c[1] - c[3] / 2,
                          c[0] + c[2] / 2, c[1] + c[3] / 2]) + jitter

    boxes = jnp.stack([
        jnp.stack([gt_from_prior(5, 0.01), gt_from_prior(20, -0.01)]),
        jnp.stack([gt_from_prior(3, 0.005), gt_from_prior(27, 0.0)]),
    ])                                                # (B, G, 4)
    lmk = jax.random.uniform(k3, (B, G, 14), jnp.float32)
    labels = jnp.ones((B, G, 1), jnp.float32)
    targets = jnp.concatenate([boxes, lmk, labels], axis=-1)   # (B, G, 19)

    loss_fn = jax.jit(functools.partial(
        multibox_loss, overlap_thresh=0.35, neg_pos_ratio=3))
    loss_l, loss_c, loss_landm = loss_fn(conf_data, reg_data, priors, targets)
    jax.block_until_ready((loss_l, loss_c, loss_landm))

    ref_fn = jax.jit(functools.partial(
        multibox_loss_reference, overlap_thresh=0.35, neg_pos_ratio=3))
    ref_l, ref_c, ref_landm = ref_fn(conf_data, reg_data, priors, targets)
    jax.block_until_ready((ref_l, ref_c, ref_landm))

    assert jnp.isfinite(loss_l) and jnp.isfinite(loss_c) and jnp.isfinite(loss_landm)
    for got, want in ((loss_l, ref_l), (loss_c, ref_c), (loss_landm, ref_landm)):
        assert jnp.allclose(got, want, rtol=5e-2, atol=1e-4), (got, want)
    print("KERNEL_OK")
</pallas_src>

<mosaic_0001>
module attributes {stable_mosaic.version = 11 : i64} {
  func.func @_multibox_loss_kernel(%arg0: i32, %arg1: i32, %arg2: memref<20x1024xf32, #tpu.memory_space<vmem>>, %arg3: memref<24x128xf32, #tpu.memory_space<vmem>>, %arg4: memref<8x128xf32, #tpu.memory_space<vmem>>) attributes {dimension_semantics = [#tpu.dimension_semantics<parallel>, #tpu.dimension_semantics<arbitrary>], iteration_bounds = array<i64: 2, 1>, scalar_prefetch = 0 : i64, scratch_operands = 0 : i64, tpu.core_type = #tpu.core_type<tc>, window_params = [{transform_indices = @transform_0, window_bounds = array<i64: 20, 1024>}, {transform_indices = @transform_1, window_bounds = array<i64: 24, 128>}, {transform_indices = @transform_2, window_bounds = array<i64: 8, 128>}]} {
    %c0_i32 = arith.constant 0 : i32
    %0 = arith.cmpi eq, %arg1, %c0_i32 : i32
    %1 = arith.extui %0 : i1 to i32
    %c0_i32_0 = arith.constant 0 : i32
    %2 = arith.cmpi ne, %1, %c0_i32_0 : i32
    scf.if %2 {
      %cst_40 = arith.constant 0.000000e+00 : f32
      %102 = vector.broadcast %cst_40 : f32 to vector<8x128xf32>
      %c0_41 = arith.constant 0 : index
      %c0_42 = arith.constant 0 : index
      %103 = vector.load %arg4[%c0_41, %c0_42] : memref<8x128xf32, #tpu.memory_space<vmem>>, vector<8x128xf32>
      tpu.vector_store %arg4[%c0_41, %c0_42], %102 {strides = array<i32>} : memref<8x128xf32, #tpu.memory_space<vmem>>, vector<8x128xf32>,
    } else {
    }
    %c0 = arith.constant 0 : index
    %c0_1 = arith.constant 0 : index
    %3 = vector.load %arg2[%c0, %c0_1] : memref<20x1024xf32, #tpu.memory_space<vmem>>, vector<16x1024xf32>
    %cst = arith.constant 1.000000e+01 : f32
    %4 = vector.broadcast %cst : f32 to vector<16x1024xf32>
    %5 = arith.cmpf olt, %3, %4 : vector<16x1024xf32>
    %cst_2 = arith.constant 5.000000e-01 : f32
    %6 = vector.broadcast %cst_2 : f32 to vector<16x1024xf32>
    %7 = arith.mulf %3, %6 : vector<16x1024xf32>
    %cst_3 = arith.constant 1.000000e+00 : f32
    %8 = vector.broadcast %cst_3 : f32 to vector<16x1024xf32>
    %9 = arith.addf %8, %7 : vector<16x1024xf32>
    %10 = math.log %9 : vector<16x1024xf32>
    %cst_4 = arith.constant 1.000000e+01 : f32
    %11 = vector.broadcast %cst_4 : f32 to vector<16x1024xf32>
    %12 = arith.mulf %11, %10 : vector<16x1024xf32>
    %cst_5 = arith.constant -7.9175949 : f32
    %13 = vector.broadcast %cst_5 : f32 to vector<16x1024xf32>
    %14 = arith.subf %3, %13 : vector<16x1024xf32>
    %15 = arith.select %5, %12, %14 : vector<16x1024xi1>, vector<16x1024xf32>
    %c16 = arith.constant 16 : index
    %c0_6 = arith.constant 0 : index
    %16 = vector.load %arg2[%c16, %c0_6] : memref<20x1024xf32, #tpu.memory_space<vmem>>, vector<4x1024xf32>
    %cst_7 = arith.constant 1.000000e+00 : f32
    %17 = vector.broadcast %cst_7 : f32 to vector<4x1024xf32>
    %18 = arith.cmpf olt, %16, %17 : vector<4x1024xf32>
    %cst_8 = arith.constant 5.000000e-01 : f32
    %19 = vector.broadcast %cst_8 : f32 to vector<4x1024xf32>
    %20 = arith.mulf %19, %16 : vector<4x1024xf32>
    %21 = arith.mulf %20, %16 : vector<4x1024xf32>
    %cst_9 = arith.constant 5.000000e-01 : f32
    %22 = vector.broadcast %cst_9 : f32 to vector<4x1024xf32>
    %23 = arith.subf %16, %22 : vector<4x1024xf32>
    %24 = arith.select %18, %21, %23 : vector<4x1024xi1>, vector<4x1024xf32>
    %c0_10 = arith.constant 0 : index
    %c0_11 = arith.constant 0 : index
    %25 = vector.load %arg3[%c0_10, %c0_11] : memref<24x128xf32, #tpu.memory_space<vmem>>, vector<8x128xf32>
    %c8 = arith.constant 8 : index
    %c0_12 = arith.constant 0 : index
    %26 = vector.load %arg3[%c8, %c0_12] : memref<24x128xf32, #tpu.memory_space<vmem>>, vector<8x128xf32>
    %c16_13 = arith.constant 16 : index
    %c0_14 = arith.constant 0 : index
    %27 = vector.load %arg3[%c16_13, %c0_14] : memref<24x128xf32, #tpu.memory_space<vmem>>, vector<8x128xf32>
    %28 = math.absf %25 : vector<8x128xf32>
    %cst_15 = arith.constant 0.000000e+00 : f32
    %29 = vector.broadcast %cst_15 : f32 to vector<8x128xf32>
    %30 = arith.subf %29, %28 : vector<8x128xf32>
    %31 = math.exp %30 : vector<8x128xf32>
    %cst_16 = arith.constant 1.000000e+00 : f32
    %32 = vector.broadcast %cst_16 : f32 to vector<8x128xf32>
    %33 = arith.addf %32, %31 : vector<8x128xf32>
    %34 = math.log %33 : vector<8x128xf32>
    %cst_17 = arith.constant 0.000000e+00 : f32
    %35 = vector.broadcast %cst_17 : f32 to vector<8x128xf32>
    %36 = arith.minimumf %25, %35 : vector<8x128xf32>
    %37 = arith.subf %36, %34 : vector<8x128xf32>
    %cst_18 = arith.constant 0.000000e+00 : f32
    %38 = vector.broadcast %cst_18 : f32 to vector<8x128xf32>
    %39 = arith.subf %38, %25 : vector<8x128xf32>
    %cst_19 = arith.constant 0.000000e+00 : f32
    %40 = vector.broadcast %cst_19 : f32 to vector<8x128xf32>
    %41 = arith.minimumf %39, %40 : vector<8x128xf32>
    %42 = arith.subf %41, %34 : vector<8x128xf32>
    %cst_20 = arith.constant 1.000000e+00 : f32
    %43 = vector.broadcast %cst_20 : f32 to vector<8x128xf32>
    %44 = arith.addf %43, %31 : vector<8x128xf32>
    %45 = tpu.reciprocal %44 {approx = true} : vector<8x128xf32> -> vector<8x128xf32>
    %cst_21 = arith.constant 0.000000e+00 : f32
    %46 = vector.broadcast %cst_21 : f32 to vector<8x128xf32>
    %47 = arith.cmpf oge, %25, %46 : vector<8x128xf32>
    %cst_22 = arith.constant 1.000000e+00 : f32
    %48 = vector.broadcast %cst_22 : f32 to vector<8x128xf32>
    %49 = arith.subf %48, %45 : vector<8x128xf32>
    %50 = arith.select %47, %45, %49 : vector<8x128xi1>, vector<8x128xf32>
    %cst_23 = arith.constant 0.000000e+00 : f32
    %51 = vector.broadcast %cst_23 : f32 to vector<8x128xf32>
    %52 = arith.subf %51, %26 : vector<8x128xf32>
    %cst_24 = arith.constant 7.500000e-01 : f32
    %53 = vector.broadcast %cst_24 : f32 to vector<8x128xf32>
    %54 = arith.mulf %52, %53 : vector<8x128xf32>
    %cst_25 = arith.constant 1.000000e+00 : f32
    %55 = vector.broadcast %cst_25 : f32 to vector<8x128xf32>
    %56 = arith.subf %55, %50 : vector<8x128xf32>
    %cst_26 = arith.constant 2.000000e+00 : f32
    %57 = vector.broadcast %cst_26 : f32 to vector<8x128xf32>
    %58 = arith.mulf %56, %57 : vector<8x128xf32>
    %59 = arith.mulf %54, %58 : vector<8x128xf32>
    %60 = arith.mulf %59, %37 : vector<8x128xf32>
    %cst_27 = arith.constant 1.000000e+00 : f32
    %61 = vector.broadcast %cst_27 : f32 to vector<8x128xf32>
    %62 = arith.subf %61, %26 : vector<8x128xf32>
    %cst_28 = arith.constant 2.500000e-01 : f32
    %63 = vector.broadcast %cst_28 : f32 to vector<8x128xf32>
    %64 = arith.mulf %62, %63 : vector<8x128xf32>
    %65 = arith.mulf %50, %50 : vector<8x128xf32>
    %66 = arith.mulf %64, %65 : vector<8x128xf32>
    %67 = arith.mulf %66, %42 : vector<8x128xf32>
    %68 = arith.subf %60, %67 : vector<8x128xf32>
    %cst_29 = arith.constant 0.000000e+00 : f32
    %69 = vector.broadcast %cst_29 : f32 to vector<8x128xf32>
    %70 = arith.cmpf ogt, %27, %69 : vector<8x128xf32>
    %cst_30 = arith.constant 0.000000e+00 : f32
    %71 = vector.broadcast %cst_30 : f32 to vector<8x128xf32>
    %72 = arith.select %70, %68, %71 : vector<8x128xi1>, vector<8x128xf32>
    %73 = vector.shape_cast %24 : vector<4x1024xf32> to vector<1x4x1024xf32>
    %cst_31 = arith.constant dense<0.000000e+00> : vector<1xf32>
    %74 = vector.multi_reduction <add>, %73, %cst_31 [1, 2] : vector<1x4x1024xf32> to vector<1xf32>
    %75 = vector.shape_cast %74 : vector<1xf32> to vector<1x1x1xf32>
    %76 = vector.extract %75[0, 0, 0] : f32 from vector<1x1x1xf32>
    %77 = vector.shape_cast %15 : vector<16x1024xf32> to vector<1x16x1024xf32>
    %cst_32 = arith.constant dense<0.000000e+00> : vector<1xf32>
    %78 = vector.multi_reduction <add>, %77, %cst_32 [1, 2] : vector<1x16x1024xf32> to vector<1xf32>
    %79 = vector.shape_cast %78 : vector<1xf32> to vector<1x1x1xf32>
    %80 = vector.extract %79[0, 0, 0] : f32 from vector<1x1x1xf32>
    %81 = vector.shape_cast %72 : vector<8x128xf32> to vector<1x8x128xf32>
    %cst_33 = arith.constant dense<0.000000e+00> : vector<1xf32>
    %82 = vector.multi_reduction <add>, %81, %cst_33 [1, 2] : vector<1x8x128xf32> to vector<1xf32>
    %83 = vector.shape_cast %82 : vector<1xf32> to vector<1x1x1xf32>
    %84 = vector.extract %83[0, 0, 0] : f32 from vector<1x1x1xf32>
    %85 = tpu.iota {dimensions = array<i32: 0>} : vector<8x128xi32>
    %c0_i32_34 = arith.constant 0 : i32
    %86 = vector.broadcast %c0_i32_34 : i32 to vector<8x128xi32>
    %87 = arith.cmpi eq, %85, %86 : vector<8x128xi32>
    %c1_i32 = arith.constant 1 : i32
    %88 = vector.broadcast %c1_i32 : i32 to vector<8x128xi32>
    %89 = arith.cmpi eq, %85, %88 : vector<8x128xi32>
    %c2_i32 = arith.constant 2 : i32
    %90 = vector.broadcast %c2_i32 : i32 to vector<8x128xi32>
    %91 = arith.cmpi eq, %85, %90 : vector<8x128xi32>
    %cst_35 = arith.constant 0.000000e+00 : f32
    %92 = vector.broadcast %84 : f32 to vector<8x128xf32>
    %93 = vector.broadcast %cst_35 : f32 to vector<8x128xf32>
    %94 = arith.select %91, %92, %93 : vector<8x128xi1>, vector<8x128xf32>
    %95 = vector.broadcast %80 : f32 to vector<8x128xf32>
    %96 = arith.select %89, %95, %94 : vector<8x128xi1>, vector<8x128xf32>
    %97 = vector.broadcast %76 : f32 to vector<8x128xf32>
    %98 = arith.select %87, %97, %96 : vector<8x128xi1>, vector<8x128xf32>
    %c0_36 = arith.constant 0 : index
    %c0_37 = arith.constant 0 : index
    %99 = vector.load %arg4[%c0_36, %c0_37] : memref<8x128xf32, #tpu.memory_space<vmem>>, vector<8x128xf32>
    %100 = arith.addf %99, %98 : vector<8x128xf32>
    %c0_38 = arith.constant 0 : index
    %c0_39 = arith.constant 0 : index
    %101 = vector.load %arg4[%c0_38, %c0_39] : memref<8x128xf32, #tpu.memory_space<vmem>>, vector<8x128xf32>
    tpu.vector_store %arg4[%c0_38, %c0_39], %100 {strides = array<i32>} : memref<8x128xf32, #tpu.memory_space<vmem>>, vector<8x128xf32>,
    return
  }
  func.func @transform_0(%arg0: i32, %arg1: i32) -> (i32, i32) {
    %c1_i32 = arith.constant 1 : i32
    %0 = arith.muli %arg0, %c1_i32 : i32
    %1 = arith.addi %0, %arg1 : i32
    %c0_i32 = arith.constant 0 : i32
    %c0_i32_0 = arith.constant 0 : i32
    return %c0_i32, %1 : i32, i32
  }
  func.func @transform_1(%arg0: i32, %arg1: i32) -> (i32, i32) {
    %c1_i32 = arith.constant 1 : i32
    %0 = arith.muli %arg0, %c1_i32 : i32
    %1 = arith.addi %0, %arg1 : i32
    %c0_i32 = arith.constant 0 : i32
    %c0_i32_0 = arith.constant 0 : i32
    return %c0_i32, %1 : i32, i32
  }
  func.func @transform_2(%arg0: i32, %arg1: i32) -> (i32, i32) {
    %c0_i32 = arith.constant 0 : i32
    %c0_i32_0 = arith.constant 0 : i32
    return %arg0, %c0_i32 : i32, i32
  }
}

</mosaic_0001>

<llo_original>
// kernel: multibox_loss.1
$region0: #{multibox_loss.1}
  #allocation0 [shape = 'u32[]', space=smem, size = 0x4, offset = 0x4, fixed_abs, tag = 'smem constant byte address 0x4 - core index']
  #allocation1 [shape = 'u32[144,128]{1,0:T(1,128)}', space=vmem, size = 0x12000, scoped, tag = 'internal scratch']
  %s0 = inlined_call_operand.vmem [shape: f32[20,2048], index: 0, kind: input, shape index: {}]
  %s1 = inlined_call_operand.vmem [shape: f32[24,256], index: 1, kind: input, shape index: {}]
  %s2 = inlined_call_operand.vmem [shape: f32[16,128], index: 2, kind: output, shape index: {}]
  %s3 = sld [smem:[#allocation0]]
  $region106: #{multibox_loss.1} parent=0
    _
  %s5 = ssub.s32 1, %s3
  %s6 = scalar_select 0, %s5, %s3
  $region1: #{multibox_loss.1} parent=0
    #allocation2 [shape = 'u8[196608]{0}', space=vmem, size = 0x30000, scoped, tag = 'input window, operand 0']
    #allocation3 [shape = 'u8[24576]{0}', space=vmem, size = 0x6000, scoped, tag = 'input window, operand 1']
    loop: start=0, step=1, limit=4
    $region2: #{multibox_loss.1} parent=1 // loop_pre_header
      _
    $region3: #{multibox_loss.1} parent=1 // loop_header
      %s8 = sphi 0, %s12
      %p9 = scmp.ge.s32.totalorder %s8, 4
      %s15 = sphi 0, %s27
      %s16 = sphi 0, %s23
      %s17 = sphi 0, %s15
      %s18 = sphi 0, %s16
      %s19 = sphi 0, %s17
      %s20 = sphi 0, %s18
      %s32 = sphi 0, %s34
      %s35 = sphi 0, %s32
      %s36 = sphi 0, %s35
      %s52 = sphi 0, %s36
      %s60 = sphi 0, %s62
      %s63 = sphi 0, %s60
      %s64 = sphi 0, %s63
      %s80 = sphi 0, %s64
      %s86 = sphi 0, %s88
      %s89 = sphi 0, %s86
      %s90 = sphi 0, %s89
      %s106 = sphi 0, %s90
    $region4: #{multibox_loss.1} parent=1 // loop_header_branch
      %11 = sbr.rel (%p9) target = $region8
    $region5: #{multibox_loss.1} parent=1 // loop_body
      %s13 = ssub.s32 %s8, 1
      %s14 = ssub.s32 %s8, 2
      %s21 = sadd.s32 1, %s16
      %p22 = scmp.ge.s32.totalorder %s21, 1
      %s23 = scalar_select %p22, 0, %s21
      %s24 = sadd.s32 1, %s15
      %s25 = scalar_select %p22, %s24, %s15
      %p26 = scmp.ge.s32.totalorder %s25, 2
      %s27 = scalar_select %p26, 0, %s25
      %s28 = sadd.s32 %s15, %s16
      %s29 = sadd.s32 %s27, %s23
      %s30 = ssub.s32 %s28, %s29
      %p31 = scmp.eq.s32.totalorder %s30, 0
      %s33 = sadd.s32 %s32, 1
      %s34 = scalar_select %p31, %s32, %s33
      %p37 = pneg %p31
      %p38 = scmp.eq.s32.totalorder %s8, 1
      %p39 = por %p37, %p38
      %p40 = scmp.ne.s32.totalorder %s32, %s35
      %p41 = scmp.eq.s32.totalorder %s8, 0
      %p42 = por %p40, %p41
      %p43 = scmp.ne.s32.totalorder %s32, %s35
      %p44 = scmp.eq.s32.totalorder %s13, 1
      %p45 = por %p43, %p44
      %p46 = scmp.ne.s32.totalorder %s35, %s36
      %p47 = scmp.eq.s32.totalorder %s13, 0
      %p48 = por %p46, %p47
      %p49 = scmp.ne.s32.totalorder %s35, %s36
      %p50 = scmp.eq.s32.totalorder %s14, 1
      %p51 = por %p49, %p50
      %p53 = scmp.ne.s32.totalorder %s36, %s52
      %p54 = scmp.eq.s32.totalorder %s14, 0
      %p55 = por %p53, %p54
      %s56 = sadd.s32 %s15, %s16
      %s57 = sadd.s32 %s27, %s23
      %s58 = ssub.s32 %s56, %s57
      %p59 = scmp.eq.s32.totalorder %s58, 0
      %s61 = sadd.s32 %s60, 1
      %s62 = scalar_select %p59, %s60, %s61
      %p65 = pneg %p59
      %p66 = scmp.eq.s32.totalorder %s8, 1
      %p67 = por %p65, %p66
      %p68 = scmp.ne.s32.totalorder %s60, %s63
      %p69 = scmp.eq.s32.totalorder %s8, 0
      %p70 = por %p68, %p69
      %p71 = scmp.ne.s32.totalorder %s60, %s63
      %p72 = scmp.eq.s32.totalorder %s13, 1
      %p73 = por %p71, %p72
      %p74 = scmp.ne.s32.totalorder %s63, %s64
      %p75 = scmp.eq.s32.totalorder %s13, 0
      %p76 = por %p74, %p75
      %p77 = scmp.ne.s32.totalorder %s63, %s64
      %p78 = scmp.eq.s32.totalorder %s14, 1
      %p79 = por %p77, %p78
      %p81 = scmp.ne.s32.totalorder %s64, %s80
      %p82 = scmp.eq.s32.totalorder %s14, 0
      %p83 = por %p81, %p82
      %s84 = ssub.s32 %s15, %s27
      %p85 = scmp.eq.s32.totalorder %s84, 0
      %s87 = sadd.s32 %s86, 1
      %s88 = scalar_select %p85, %s86, %s87
      %p91 = pneg %p85
      %p92 = scmp.eq.s32.totalorder %s8, 1
      %p93 = por %p91, %p92
      %p94 = scmp.ne.s32.totalorder %s86, %s89
      %p95 = scmp.eq.s32.totalorder %s8, 0
      %p96 = por %p94, %p95
      %p97 = scmp.ne.s32.totalorder %s86, %s89
      %p98 = scmp.eq.s32.totalorder %s13, 1
      %p99 = por %p97, %p98
      %p100 = scmp.ne.s32.totalorder %s89, %s90
      %p101 = scmp.eq.s32.totalorder %s13, 0
      %p102 = por %p100, %p101
      %p103 = scmp.ne.s32.totalorder %s89, %s90
      %p104 = scmp.eq.s32.totalorder %s14, 1
      %p105 = por %p103, %p104
      %p107 = scmp.ne.s32.totalorder %s90, %s106
      %p108 = scmp.eq.s32.totalorder %s14, 0
      %p109 = por %p107, %p108
      %p110 = scmp.le.s32.totalorder 1, %s8
      %p111 = scmp.lt.s32.totalorder %s8, 3
      %p112 = pnand %p110, %p111
      %p113 = pneg %p112
      // Predicated region
      $region9: #{multibox_loss.1} parent=5 // pred_check
        _
      $region10: #{multibox_loss.1} parent=5 // pred_check_branch
        %115 = sbr.rel (%p112) target = $region12
      $region11: #{multibox_loss.1} parent=5 // pred_region
        %s116 = ssub.s32 %s8, 1
      $region12: #{multibox_loss.1} parent=5 // pred_fallthru
        _
      %p117 = scmp.lt.s32.totalorder %s8, 2
      // Predicated region
      $region13: #{multibox_loss.1} parent=5 // pred_check
        %p118 = pneg %p117
      $region14: #{multibox_loss.1} parent=5 // pred_check_branch
        %120 = sbr.rel (%p118) target = $region16
      $region15: #{multibox_loss.1} parent=5 // pred_region
        // Predicated region
        $region17: #{multibox_loss.1} parent=15 // pred_check
          %p121 = pneg %p42
        $region18: #{multibox_loss.1} parent=15 // pred_check_branch
          %123 = sbr.rel (%p121) target = $region20
        $region19: #{multibox_loss.1} parent=15 // pred_region
          %s124 = sand.u32 %s32, 1
          %s125 = sand.u32 %s32, 1
          %s126 = smul.addr %s125, 192
          %s127 = scalar_lea.vmem [#allocation2], %s126
          %s128 = sadd.s32 %s15, %s16
          %s129 = smul.u32 8, %s128
          %s130 = smul.addr %s129, 8
          %s131 = scalar_lea.vmem %s0, %s130
          // Predicated region
          $region21: #{multibox_loss.1} parent=19 // pred_check
            _
          $region22: #{multibox_loss.1} parent=19 // pred_check_branch
            %133 = sbr.rel (0) target = $region24
          $region23: #{multibox_loss.1} parent=19 // pred_region
            // Predicated region
            $region25: #{multibox_loss.1} parent=23 // pred_check
              _
            $region26: #{multibox_loss.1} parent=23 // pred_check_branch
              %135 = sbr.rel (0) target = $region28
            $region27: #{multibox_loss.1} parent=23 // pred_region
              loop: start=0, step=1, limit=1
              $region29: #{multibox_loss.1} parent=27 // loop_pre_header
                _
              $region30: #{multibox_loss.1} parent=27 // loop_header
                %s137 = sphi 0, %s141
                %p138 = scmp.ge.s32.totalorder %s137, 1
                %s142 = sphi %s131, %s131
                %s143 = sphi %s127, %s127
              $region31: #{multibox_loss.1} parent=27 // loop_header_branch
                %140 = sbr.rel (%p138) target = $region35
              $region32: #{multibox_loss.1} parent=27 // loop_body
                %v144 = vld [vmem:[%s142] sm:$0xff]
                %145 = vst [vmem:[%s143] sm:$0xff] %v144
                %v146 = vld [vmem:[%s142 + $0x8] sm:$0xff]
                %147 = vst [vmem:[%s143 + $0x8] sm:$0xff] %v146
                %v148 = vld [vmem:[%s142 + $0x10] sm:$0xff]
                %149 = vst [vmem:[%s143 + $0x10] sm:$0xff] %v148
                %v150 = vld [vmem:[%s142 + $0x18] sm:$0xff]
                %151 = vst [vmem:[%s143 + $0x18] sm:$0xff] %v150
                %v152 = vld [vmem:[%s142 + $0x20] sm:$0xff]
                %153 = vst [vmem:[%s143 + $0x20] sm:$0xff] %v152
                %v154 = vld [vmem:[%s142 + $0x28] sm:$0xff]
                %155 = vst [vmem:[%s143 + $0x28] sm:$0xff] %v154
                %v156 = vld [vmem:[%s142 + $0x30] sm:$0xff]
                %157 = vst [vmem:[%s143 + $0x30] sm:$0xff] %v156
                %v158 = vld [vmem:[%s142 + $0x38] sm:$0xff]
                %159 = vst [vmem:[%s143 + $0x38] sm:$0xff] %v158
                %v160 = vld [vmem:[%s142 + $0x80] sm:$0xff]
                %161 = vst [vmem:[%s143 + $0x40] sm:$0xff] %v160
                %v162 = vld [vmem:[%s142 + $0x88] sm:$0xff]
                %163 = vst [vmem:[%s143 + $0x48] sm:$0xff] %v162
                %v164 = vld [vmem:[%s142 + $0x90] sm:$0xff]
                %165 = vst [vmem:[%s143 + $0x50] sm:$0xff] %v164
                %v166 = vld [vmem:[%s142 + $0x98] sm:$0xff]
                %167 = vst [vmem:[%s143 + $0x58] sm:$0xff] %v166
                %v168 = vld [vmem:[%s142 + $0xa0] sm:$0xff]
                %169 = vst [vmem:[%s143 + $0x60] sm:$0xff] %v168
                %v170 = vld [vmem:[%s142 + $0xa8] sm:$0xff]
                %171 = vst [vmem:[%s143 + $0x68] sm:$0xff] %v170
                %v172 = vld [vmem:[%s142 + $0xb0] sm:$0xff]
                %173 = vst [vmem:[%s143 + $0x70] sm:$0xff] %v172
                %v174 = vld [vmem:[%s142 + $0xb8] sm:$0xff]
                %175 = vst [vmem:[%s143 + $0x78] sm:$0xff] %v174
                %v176 = vld [vmem:[%s142 + $0x100] sm:$0xff]
                %177 = vst [vmem:[%s143 + $0x80] sm:$0xff] %v176
                %v178 = vld [vmem:[%s142 + $0x108] sm:$0xff]
                %179 = vst [vmem:[%s143 + $0x88] sm:$0xff] %v178
                %v180 = vld [vmem:[%s142 + $0x110] sm:$0xff]
                %181 = vst [vmem:[%s143 + $0x90] sm:$0xff] %v180
                %v182 = vld [vmem:[%s142 + $0x118] sm:$0xff]
                %183 = vst [vmem:[%s143 + $0x98] sm:$0xff] %v182
                %v184 = vld [vmem:[%s142 + $0x120] sm:$0xff]
                %185 = vst [vmem:[%s143 + $0xa0] sm:$0xff] %v184
                %v186 = vld [vmem:[%s142 + $0x128] sm:$0xff]
                %187 = vst [vmem:[%s143 + $0xa8] sm:$0xff] %v186
                %v188 = vld [vmem:[%s142 + $0x130] sm:$0xff]
                %189 = vst [vmem:[%s143 + $0xb0] sm:$0xff] %v188
                %v190 = vld [vmem:[%s142 + $0x138] sm:$0xff]
                %191 = vst [vmem:[%s143 + $0xb8] sm:$0xff] %v190
              $region33: #{multibox_loss.1} parent=27 // loop_footer
                %s141 = sadd.s32 1, %s137
              $region34: #{multibox_loss.1} parent=27 // loop_footer_branch
                %136 = sbr.rel target = $region30
              $region35: #{multibox_loss.1} parent=27 // loop_exit
                _
            $region28: #{multibox_loss.1} parent=23 // pred_fallthru
              _
            // Predicated region
            $region36: #{multibox_loss.1} parent=23 // pred_check
              _
            $region37: #{multibox_loss.1} parent=23 // pred_check_branch
              %193 = sbr.rel target = $region39
            $region38: #{multibox_loss.1} parent=23 // pred_region
              _
            $region39: #{multibox_loss.1} parent=23 // pred_fallthru
              _
          $region24: #{multibox_loss.1} parent=19 // pred_fallthru
            _
          %194 = vnop
        $region20: #{multibox_loss.1} parent=15 // pred_fallthru
          _
        // Predicated region
        $region40: #{multibox_loss.1} parent=15 // pred_check
          %p195 = pneg %p70
        $region41: #{multibox_loss.1} parent=15 // pred_check_branch
          %197 = sbr.rel (%p195) target = $region43
        $region42: #{multibox_loss.1} parent=15 // pred_region
          %s198 = sand.u32 %s60, 1
          %s199 = sand.u32 %s60, 1
          %s200 = smul.addr %s199, 24
          %s201 = scalar_lea.vmem [#allocation3], %s200
          %s202 = sadd.s32 %s15, %s16
          %s203 = smul.addr %s202, 8
          %s204 = scalar_lea.vmem %s1, %s203
          // Predicated region
          $region44: #{multibox_loss.1} parent=42 // pred_check
            _
          $region45: #{multibox_loss.1} parent=42 // pred_check_branch
            %206 = sbr.rel (0) target = $region47
          $region46: #{multibox_loss.1} parent=42 // pred_region
            // Predicated region
            $region48: #{multibox_loss.1} parent=46 // pred_check
              _
            $region49: #{multibox_loss.1} parent=46 // pred_check_branch
              %208 = sbr.rel (0) target = $region51
            $region50: #{multibox_loss.1} parent=46 // pred_region
              // Predicated region
              $region63: #{multibox_loss.1} parent=50 // pred_check
                _
              $region64: #{multibox_loss.1} parent=50 // pred_check_branch
                %227 = sbr.rel (0) target = $region66
              $region65: #{multibox_loss.1} parent=50 // pred_region
                loop: start=0, step=1, limit=1
                $region67: #{multibox_loss.1} parent=65 // loop_pre_header
                  _
                $region68: #{multibox_loss.1} parent=65 // loop_header
                  %s229 = sphi 0, %s233
                  %p230 = scmp.ge.s32.totalorder %s229, 1
                  %s234 = sphi %s204, %s204
                  %s235 = sphi %s201, %s201
                $region69: #{multibox_loss.1} parent=65 // loop_header_branch
                  %232 = sbr.rel (%p230) target = $region73
                $region70: #{multibox_loss.1} parent=65 // loop_body
                  %v236 = vld [vmem:[%s234] sm:$0xff]
                  %237 = vst [vmem:[%s235] sm:$0xff] %v236
                  %v238 = vld [vmem:[%s234 + $0x10] sm:$0xff]
                  %239 = vst [vmem:[%s235 + $0x8] sm:$0xff] %v238
                  %v240 = vld [vmem:[%s234 + $0x20] sm:$0xff]
                  %241 = vst [vmem:[%s235 + $0x10] sm:$0xff] %v240
                $region71: #{multibox_loss.1} parent=65 // loop_footer
                  %s233 = sadd.s32 1, %s229
                $region72: #{multibox_loss.1} parent=65 // loop_footer_branch
                  %228 = sbr.rel target = $region68
                $region73: #{multibox_loss.1} parent=65 // loop_exit
                  _
              $region66: #{multibox_loss.1} parent=50 // pred_fallthru
                _
              // Predicated region
              $region74: #{multibox_loss.1} parent=50 // pred_check
                _
              $region75: #{multibox_loss.1} parent=50 // pred_check_branch
                %243 = sbr.rel target = $region77
              $region76: #{multibox_loss.1} parent=50 // pred_region
                _
              $region77: #{multibox_loss.1} parent=50 // pred_fallthru
                _
            $region51: #{multibox_loss.1} parent=46 // pred_fallthru
              _
            // Predicated region
            $region52: #{multibox_loss.1} parent=46 // pred_check
              _
            $region53: #{multibox_loss.1} parent=46 // pred_check_branch
              %210 = sbr.rel target = $region55
            $region54: #{multibox_loss.1} parent=46 // pred_region
              loop: start=0, step=1, limit=1
              $region56: #{multibox_loss.1} parent=54 // loop_pre_header
                _
              $region57: #{multibox_loss.1} parent=54 // loop_header
                %s213 = sphi 0, %s217
                %p214 = scmp.ge.s32.totalorder %s213, 1
                %s218 = sphi %s204, %s204
                %s219 = sphi %s201, %s201
              $region58: #{multibox_loss.1} parent=54 // loop_header_branch
                %216 = sbr.rel (%p214) target = $region62
              $region59: #{multibox_loss.1} parent=54 // loop_body
                %v220 = vld [vmem:[%s218] sm:$0xff]
                %221 = vst [vmem:[%s219] sm:$0xff] %v220
                %v222 = vld [vmem:[%s218 + $0x10] sm:$0xff]
                %223 = vst [vmem:[%s219 + $0x8] sm:$0xff] %v222
                %v224 = vld [vmem:[%s218 + $0x20] sm:$0xff]
                %225 = vst [vmem:[%s219 + $0x10] sm:$0xff] %v224
              $region60: #{multibox_loss.1} parent=54 // loop_footer
                %s217 = sadd.s32 1, %s213
              $region61: #{multibox_loss.1} parent=54 // loop_footer_branch
                %212 = sbr.rel target = $region57
              $region62: #{multibox_loss.1} parent=54 // loop_exit
                _
            $region55: #{multibox_loss.1} parent=46 // pred_fallthru
              _
          $region47: #{multibox_loss.1} parent=42 // pred_fallthru
            _
          %244 = vnop
        $region43: #{multibox_loss.1} parent=15 // pred_fallthru
          _
      $region16: #{multibox_loss.1} parent=5 // pred_fallthru
        _
      %p245 = scmp.le.s32.totalorder 1, %s8
      %p246 = scmp.lt.s32.totalorder %s8, 3
      %p247 = pnand %p245, %p246
      %p248 = pneg %p247
      // Predicated region
      $region78: #{multibox_loss.1} parent=5 // pred_check
        _
      $region79: #{multibox_loss.1} parent=5 // pred_check_branch
        %250 = sbr.rel (%p247) target = $region81
      $region80: #{multibox_loss.1} parent=5 // pred_region
        %s251 = ssub.s32 %s8, 1
        %s252 = sand.u32 %s35, 1
        %s253 = sand.u32 %s35, 1
        %s254 = smul.addr %s253, 192
        %s255 = scalar_lea.vmem [#allocation2], %s254
        // Predicated region
        $region82: #{multibox_loss.1} parent=80 // pred_check
          %p256 = pneg %p48
        $region83: #{multibox_loss.1} parent=80 // pred_check_branch
          %258 = sbr.rel (%p256) target = $region85
        $region84: #{multibox_loss.1} parent=80 // pred_region
          _
        $region85: #{multibox_loss.1} parent=80 // pred_fallthru
          _
        %s259 = sand.u32 %s63, 1
        %s260 = sand.u32 %s63, 1
        %s261 = smul.addr %s260, 24
        %s262 = scalar_lea.vmem [#allocation3], %s261
        // Predicated region
        $region86: #{multibox_loss.1} parent=80 // pred_check
          %p263 = pneg %p76
        $region87: #{multibox_loss.1} parent=80 // pred_check_branch
          %265 = sbr.rel (%p263) target = $region89
        $region88: #{multibox_loss.1} parent=80 // pred_region
          _
        $region89: #{multibox_loss.1} parent=80 // pred_fallthru
          _
        %s266 = sand.u32 %s35, 1
        %s267 = sand.u32 %s35, 1
        %s268 = smul.addr %s267, 192
        %s269 = scalar_lea.vmem [#allocation2], %s268
        %p270 = pneg %p48
        %p271 = pneg %p45
        %s272 = sand.u32 %s63, 1
        %s273 = sand.u32 %s63, 1
        %s274 = smul.addr %s273, 24
        %s275 = scalar_lea.vmem [#allocation3], %s274
        %p276 = pneg %p76
        %p277 = pneg %p73
        %p278 = pneg %p102
        %p279 = pneg %p99
        %p280 = scmp.lt.s32.totalorder %s17, 1
        %s281 = scalar_select %p280, %s17, 1
        %s282 = smul.addr %s281, 8
        %s283 = scalar_lea.vmem %s2, %s282
        %s284 = sadd.s32 %s17, %s18
        %s285 = smul.u32 8, %s284
        %s286 = sadd.s32 %s17, %s18
        %p287 = scmp.lt.s32.totalorder %s17, 1
        %s288 = scalar_select %p287, %s17, 1
        %s289 = smul.addr %s288, 8
        %s290 = scalar_lea.vmem %s2, %s289
        %p291 = scmp.eq.s32.totalorder %s18, 0
        // Predicated region
        $region90: #{multibox_loss.1} parent=80 // pred_check
          %p292 = pneg %p291
        $region91: #{multibox_loss.1} parent=80 // pred_check_branch
          %294 = sbr.rel (%p292) target = $region93
        $region92: #{multibox_loss.1} parent=80 // pred_region
          %295 = vst [vmem:[%s290] sm:$0xff] 0.0
        $region93: #{multibox_loss.1} parent=80 // pred_fallthru
          _
        %v296 = vld [vmem:[%s255] sm:$0xff]
        %v297 = vld [vmem:[%s255 + $0x8] sm:$0xff]
        %v298 = vld [vmem:[%s255 + $0x10] sm:$0xff]
        %v299 = vld [vmem:[%s255 + $0x18] sm:$0xff]
        %v300 = vld [vmem:[%s255 + $0x20] sm:$0xff]
        %v301 = vld [vmem:[%s255 + $0x28] sm:$0xff]
        %v302 = vld [vmem:[%s255 + $0x30] sm:$0xff]
        %v303 = vld [vmem:[%s255 + $0x38] sm:$0xff]
        %v304 = vld [vmem:[%s255 + $0x40] sm:$0xff]
        %v305 = vld [vmem:[%s255 + $0x48] sm:$0xff]
        %v306 = vld [vmem:[%s255 + $0x50] sm:$0xff]
        %v307 = vld [vmem:[%s255 + $0x58] sm:$0xff]
        %v308 = vld [vmem:[%s255 + $0x60] sm:$0xff]
        %v309 = vld [vmem:[%s255 + $0x68] sm:$0xff]
        %v310 = vld [vmem:[%s255 + $0x70] sm:$0xff]
        %v311 = vld [vmem:[%s255 + $0x78] sm:$0xff]
        %vm312 = vcmp.lt.f32.partialorder %v296, 10.0
        %vm313 = vcmp.lt.f32.partialorder %v297, 10.0
        %vm314 = vcmp.lt.f32.partialorder %v298, 10.0
        %vm315 = vcmp.lt.f32.partialorder %v299, 10.0
        %vm316 = vcmp.lt.f32.partialorder %v300, 10.0
        %vm317 = vcmp.lt.f32.partialorder %v301, 10.0
        %vm318 = vcmp.lt.f32.partialorder %v302, 10.0
        %vm319 = vcmp.lt.f32.partialorder %v303, 10.0
        %vm320 = vcmp.lt.f32.partialorder %v304, 10.0
        %vm321 = vcmp.lt.f32.partialorder %v305, 10.0
        %vm322 = vcmp.lt.f32.partialorder %v306, 10.0
        %vm323 = vcmp.lt.f32.partialorder %v307, 10.0
        %vm324 = vcmp.lt.f32.partialorder %v308, 10.0
        %vm325 = vcmp.lt.f32.partialorder %v309, 10.0
        %vm326 = vcmp.lt.f32.partialorder %v310, 10.0
        %vm327 = vcmp.lt.f32.partialorder %v311, 10.0
        %v328 = vmul.f32 %v296, 0.5
        %v329 = vmul.f32 %v297, 0.5
        %v330 = vmul.f32 %v298, 0.5
        %v331 = vmul.f32 %v299, 0.5
        %v332 = vmul.f32 %v300, 0.5
        %v333 = vmul.f32 %v301, 0.5
        %v334 = vmul.f32 %v302, 0.5
        %v335 = vmul.f32 %v303, 0.5
        %v336 = vmul.f32 %v304, 0.5
        %v337 = vmul.f32 %v305, 0.5
        %v338 = vmul.f32 %v306, 0.5
        %v339 = vmul.f32 %v307, 0.5
        %v340 = vmul.f32 %v308, 0.5
        %v341 = vmul.f32 %v309, 0.5
        %v342 = vmul.f32 %v310, 0.5
        %v343 = vmul.f32 %v311, 0.5
        %v344 = vadd.f32 %v328, 1.0
        %v345 = vadd.f32 %v329, 1.0
        %v346 = vadd.f32 %v330, 1.0
        %v347 = vadd.f32 %v331, 1.0
        %v348 = vadd.f32 %v332, 1.0
        %v349 = vadd.f32 %v333, 1.0
        %v350 = vadd.f32 %v334, 1.0
        %v351 = vadd.f32 %v335, 1.0
        %v352 = vadd.f32 %v336, 1.0
        %v353 = vadd.f32 %v337, 1.0
        %v354 = vadd.f32 %v338, 1.0
        %v355 = vadd.f32 %v339, 1.0
        %v356 = vadd.f32 %v340, 1.0
        %v357 = vadd.f32 %v341, 1.0
        %v358 = vadd.f32 %v342, 1.0
        %v359 = vadd.f32 %v343, 1.0
        %v360 = vlog2.pop %v344
        %v361 = vmul.f32 %v360, 0.6931472
        %v362 = vlog2.pop %v345
        %v363 = vmul.f32 %v362, 0.6931472
        %v364 = vlog2.pop %v346
        %v365 = vmul.f32 %v364, 0.6931472
        %v366 = vlog2.pop %v347
        %v367 = vmul.f32 %v366, 0.6931472
        %v368 = vlog2.pop %v348
        %v369 = vmul.f32 %v368, 0.6931472
        %v370 = vlog2.pop %v349
        %v371 = vmul.f32 %v370, 0.6931472
        %v372 = vlog2.pop %v350
        %v373 = vmul.f32 %v372, 0.6931472
        %v374 = vlog2.pop %v351
        %v375 = vmul.f32 %v374, 0.6931472
        %v376 = vlog2.pop %v352
        %v377 = vmul.f32 %v376, 0.6931472
        %v378 = vlog2.pop %v353
        %v379 = vmul.f32 %v378, 0.6931472
        %v380 = vlog2.pop %v354
        %v381 = vmul.f32 %v380, 0.6931472
        %v382 = vlog2.pop %v355
        %v383 = vmul.f32 %v382, 0.6931472
        %v384 = vlog2.pop %v356
        %v385 = vmul.f32 %v384, 0.6931472
        %v386 = vlog2.pop %v357
        %v387 = vmul.f32 %v386, 0.6931472
        %v388 = vlog2.pop %v358
        %v389 = vmul.f32 %v388, 0.6931472
        %v390 = vlog2.pop %v359
        %v391 = vmul.f32 %v390, 0.6931472
        %v392 = vmul.f32 %v361, 10.0
        %v393 = vmul.f32 %v363, 10.0
        %v394 = vmul.f32 %v365, 10.0
        %v395 = vmul.f32 %v367, 10.0
        %v396 = vmul.f32 %v369, 10.0
        %v397 = vmul.f32 %v371, 10.0
        %v398 = vmul.f32 %v373, 10.0
        %v399 = vmul.f32 %v375, 10.0
        %v400 = vmul.f32 %v377, 10.0
        %v401 = vmul.f32 %v379, 10.0
        %v402 = vmul.f32 %v381, 10.0
        %v403 = vmul.f32 %v383, 10.0
        %v404 = vmul.f32 %v385, 10.0
        %v405 = vmul.f32 %v387, 10.0
        %v406 = vmul.f32 %v389, 10.0
        %v407 = vmul.f32 %v391, 10.0
        %v408 = vsub.f32 %v296, -7.917595
        %v409 = vsub.f32 %v297, -7.917595
        %v410 = vsub.f32 %v298, -7.917595
        %v411 = vsub.f32 %v299, -7.917595
        %v412 = vsub.f32 %v300, -7.917595
        %v413 = vsub.f32 %v301, -7.917595
        %v414 = vsub.f32 %v302, -7.917595
        %v415 = vsub.f32 %v303, -7.917595
        %v416 = vsub.f32 %v304, -7.917595
        %v417 = vsub.f32 %v305, -7.917595
        %v418 = vsub.f32 %v306, -7.917595
        %v419 = vsub.f32 %v307, -7.917595
        %v420 = vsub.f32 %v308, -7.917595
        %v421 = vsub.f32 %v309, -7.917595
        %v422 = vsub.f32 %v310, -7.917595
        %v423 = vsub.f32 %v311, -7.917595
        %v424 = vsel %vm312, %v392, %v408
        %v425 = vsel %vm313, %v393, %v409
        %v426 = vsel %vm314, %v394, %v410
        %v427 = vsel %vm315, %v395, %v411
        %v428 = vsel %vm316, %v396, %v412
        %v429 = vsel %vm317, %v397, %v413
        %v430 = vsel %vm318, %v398, %v414
        %v431 = vsel %vm319, %v399, %v415
        %v432 = vsel %vm320, %v400, %v416
        %v433 = vsel %vm321, %v401, %v417
        %v434 = vsel %vm322, %v402, %v418
        %v435 = vsel %vm323, %v403, %v419
        %v436 = vsel %vm324, %v404, %v420
        %v437 = vsel %vm325, %v405, %v421
        %v438 = vsel %vm326, %v406, %v422
        %v439 = vsel %vm327, %v407, %v423
        %v440 = vld [vmem:[%s255 + $0x80] sm:$0xf]
        %v441 = vld [vmem:[%s255 + $0x88] sm:$0xf]
        %v442 = vld [vmem:[%s255 + $0x90] sm:$0xf]
        %v443 = vld [vmem:[%s255 + $0x98] sm:$0xf]
        %v444 = vld [vmem:[%s255 + $0xa0] sm:$0xf]
        %v445 = vld [vmem:[%s255 + $0xa8] sm:$0xf]
        %v446 = vld [vmem:[%s255 + $0xb0] sm:$0xf]
        %v447 = vld [vmem:[%s255 + $0xb8] sm:$0xf]
        %vm448 = vcmp.lt.f32.partialorder %v440, 1.0
        %vm449 = vcmp.lt.f32.partialorder %v441, 1.0
        %vm450 = vcmp.lt.f32.partialorder %v442, 1.0
        %vm451 = vcmp.lt.f32.partialorder %v443, 1.0
        %vm452 = vcmp.lt.f32.partialorder %v444, 1.0
        %vm453 = vcmp.lt.f32.partialorder %v445, 1.0
        %vm454 = vcmp.lt.f32.partialorder %v446, 1.0
        %vm455 = vcmp.lt.f32.partialorder %v447, 1.0
        %v456 = vmul.f32 %v440, 0.5
        %v457 = vmul.f32 %v441, 0.5
        %v458 = vmul.f32 %v442, 0.5
        %v459 = vmul.f32 %v443, 0.5
        %v460 = vmul.f32 %v444, 0.5
        %v461 = vmul.f32 %v445, 0.5
        %v462 = vmul.f32 %v446, 0.5
        %v463 = vmul.f32 %v447, 0.5
        %v464 = vmul.f32 %v456, %v440
        %v465 = vmul.f32 %v457, %v441
        %v466 = vmul.f32 %v458, %v442
        %v467 = vmul.f32 %v459, %v443
        %v468 = vmul.f32 %v460, %v444
        %v469 = vmul.f32 %v461, %v445
        %v470 = vmul.f32 %v462, %v446
        %v471 = vmul.f32 %v463, %v447
        %v472 = vsub.f32 %v440, 0.5
        %v473 = vsub.f32 %v441, 0.5
        %v474 = vsub.f32 %v442, 0.5
        %v475 = vsub.f32 %v443, 0.5
        %v476 = vsub.f32 %v444, 0.5
        %v477 = vsub.f32 %v445, 0.5
        %v478 = vsub.f32 %v446, 0.5
        %v479 = vsub.f32 %v447, 0.5
        %v480 = vsel %vm448, %v464, %v472
        %v481 = vsel %vm449, %v465, %v473
        %v482 = vsel %vm450, %v466, %v474
        %v483 = vsel %vm451, %v467, %v475
        %v484 = vsel %vm452, %v468, %v476
        %v485 = vsel %vm453, %v469, %v477
        %v486 = vsel %vm454, %v470, %v478
        %v487 = vsel %vm455, %v471, %v479
        %v488 = vld [vmem:[%s262] sm:$0xff]
        %v489 = vld [vmem:[%s262 + $0x8] sm:$0xff]
        %v490 = vld [vmem:[%s262 + $0x10] sm:$0xff]
        %v491 = vand.u32 2147483647, %v488
        %v492 = vsub.f32 0.0, %v491
        %v493 = vmul.f32 %v492, 1.442695
        %v494 = vpow.pop %v493
        %v495 = vadd.f32 %v494, 1.0
        %v496 = vlog2.pop %v495
        %v497 = vmul.f32 %v496, 0.6931472
        %v498 = vmin.f32 %v488, 0.0
        %v499 = vsub.f32 %v498, %v497
        %v500 = vsub.f32 0.0, %v488
        %v501 = vmin.f32 %v500, 0.0
        %v502 = vsub.f32 %v501, %v497
        %v503 = vrcp.pop %v495
        %vm504 = vcmp.ge.f32.partialorder %v488, 0.0
        %v505 = vsub.f32 1.0, %v503
        %v506 = vsel %vm504, %v503, %v505
        %v507 = vsub.f32 0.0, %v489
        %v508 = vmul.f32 %v507, 0.75
        %v509 = vsub.f32 1.0, %v506
        %v510 = vmul.f32 %v509, 2.0
        %v511 = vmul.f32 %v508, %v510
        %v512 = vmul.f32 %v511, %v499
        %v513 = vsub.f32 1.0, %v489
        %v514 = vmul.f32 %v513, 0.25
        %v515 = vmul.f32 %v506, %v506
        %v516 = vmul.f32 %v514, %v515
        %v517 = vmul.f32 %v516, %v502
        %v518 = vsub.f32 %v512, %v517
        %vm519 = vcmp.gt.f32.partialorder %v490, 0.0
        %v520 = vsel %vm519, %v518, 0.0
        %vm521 = vcmask 1043456
        %v522 = vsel %vm521, %v480, 0.0
        %v523 = vsel %vm521, %v481, 0.0
        %v524 = vadd.f32 %v522, %v523
        %v525 = vsel %vm521, %v482, 0.0
        %v526 = vadd.f32 %v524, %v525
        %v527 = vsel %vm521, %v483, 0.0
        %v528 = vadd.f32 %v526, %v527
        %v529 = vsel %vm521, %v484, 0.0
        %v530 = vadd.f32 %v528, %v529
        %v531 = vsel %vm521, %v485, 0.0
        %v532 = vadd.f32 %v530, %v531
        %v533 = vsel %vm521, %v486, 0.0
        %v534 = vadd.f32 %v532, %v533
        %v535 = vsel %vm521, %v487, 0.0
        %v536 = vadd.f32 %v534, %v535
        %537 = vadd.xlane.f32.xlu0 %v536
        %v538 = vpop.xlane.xlu0 %537
        %v539 = vrot.slane %v538, 4
        %v540 = vadd.f32 %v538, %v539
        %v541 = vrot.slane %v540, 2
        %v542 = vadd.f32 %v540, %v541
        %v543 = vrot.slane %v542, 1
        %v544 = vadd.f32 %v542, %v543
        %s545 = vtos %v544
        %v546 = vadd.f32 %v424, %v425
        %v547 = vadd.f32 %v546, %v426
        %v548 = vadd.f32 %v547, %v427
        %v549 = vadd.f32 %v548, %v428
        %v550 = vadd.f32 %v549, %v429
        %v551 = vadd.f32 %v550, %v430
        %v552 = vadd.f32 %v551, %v431
        %v553 = vadd.f32 %v552, %v432
        %v554 = vadd.f32 %v553, %v433
        %v555 = vadd.f32 %v554, %v434
        %v556 = vadd.f32 %v555, %v435
        %v557 = vadd.f32 %v556, %v436
        %v558 = vadd.f32 %v557, %v437
        %v559 = vadd.f32 %v558, %v438
        %v560 = vadd.f32 %v559, %v439
        %561 = vadd.xlane.f32.xlu0 %v560
        %v562 = vpop.xlane.xlu0 %561
        %v563 = vrot.slane %v562, 4
        %v564 = vadd.f32 %v562, %v563
        %v565 = vrot.slane %v564, 2
        %v566 = vadd.f32 %v564, %v565
        %v567 = vrot.slane %v566, 1
        %v568 = vadd.f32 %v566, %v567
        %s569 = vtos %v568
        %570 = vadd.xlane.f32.xlu0 %v520
        %v571 = vpop.xlane.xlu0 %570
        %v572 = vrot.slane %v571, 4
        %v573 = vadd.f32 %v571, %v572
        %v574 = vrot.slane %v573, 2
        %v575 = vadd.f32 %v573, %v574
        %v576 = vrot.slane %v575, 1
        %v577 = vadd.f32 %v575, %v576
        %s578 = vtos %v577
        %v579 = vlaneseq
        %v580 = vshrl.u32 %v579, 7
        %vm581 = vcmp.eq.s32.totalorder %v580, 0
        %vm582 = vcmp.eq.s32.totalorder %v580, 1
        %vm583 = vcmp.eq.s32.totalorder %v580, 2
        %v584 = vstv %s578
        %v585 = vsel %vm583, %v584, 0.0
        %v586 = vstv %s569
        %v587 = vsel %vm582, %v586, %v585
        %v588 = vstv %s545
        %v589 = vsel %vm581, %v588, %v587
        %v590 = vld [vmem:[%s290] sm:$0xff]
        %v591 = vadd.f32 %v590, %v589
        %592 = vst [vmem:[%s290] sm:$0xff] %v591
        %p593 = scmp.lt.s32.totalorder %s17, 1
        %s594 = scalar_select %p593, %s17, 1
        %s595 = smul.addr %s594, 8
        %s596 = scalar_lea.vmem %s2, %s595
        // Predicated region
        $region94: #{multibox_loss.1} parent=80 // pred_check
          %p597 = pneg %p99
        $region95: #{multibox_loss.1} parent=80 // pred_check_branch
          %599 = sbr.rel (%p597) target = $region97
        $region96: #{multibox_loss.1} parent=80 // pred_region
          _
        $region97: #{multibox_loss.1} parent=80 // pred_fallthru
          _
      $region81: #{multibox_loss.1} parent=5 // pred_fallthru
        _
      %p600 = scmp.le.s32.totalorder 2, %s8
      // Predicated region
      $region98: #{multibox_loss.1} parent=5 // pred_check
        %p601 = pneg %p600
      $region99: #{multibox_loss.1} parent=5 // pred_check_branch
        %603 = sbr.rel (%p601) target = $region101
      $region100: #{multibox_loss.1} parent=5 // pred_region
        %s604 = ssub.s32 %s8, 2
        // Predicated region
        $region102: #{multibox_loss.1} parent=100 // pred_check
          %p605 = pneg %p105
        $region103: #{multibox_loss.1} parent=100 // pred_check_branch
          %607 = sbr.rel (%p605) target = $region105
        $region104: #{multibox_loss.1} parent=100 // pred_region
          %p608 = scmp.lt.s32.totalorder %s19, 1
          %s609 = scalar_select %p608, %s19, 1
          %s610 = smul.addr %s609, 8
          %s611 = scalar_lea.vmem %s2, %s610
        $region105: #{multibox_loss.1} parent=100 // pred_fallthru
          _
      $region101: #{multibox_loss.1} parent=5 // pred_fallthru
        _
    $region6: #{multibox_loss.1} parent=1 // loop_footer
      %s12 = sadd.s32 1, %s8
    $region7: #{multibox_loss.1} parent=1 // loop_footer_branch
      %7 = sbr.rel target = $region3
    $region8: #{multibox_loss.1} parent=1 // loop_exit
      _

</llo_original>
